<compile_context>
chip_gen: v6e
topology: v6e:2x2x1
jax: 0.10.0
libtpu: 0.0.40
codegen_flags: <defaults>
</compile_context>

<pallas_src>
import functools
import math

import jax
import jax.numpy as jnp
from jax.experimental import pallas as pl
from jax.experimental.pallas import tpu as pltpu


def _round_up(x, m):
    return ((x + m - 1) // m) * m


def csn_kernel(x_ref, w_ref, b_ref, masks_ref, c_ref, valid_ref,
               masked_ref, partials_ref, *, nc):
    # x_ref       : VMEM (Bp, tk)   bf16   K-tile of flattened input
    # w_ref       : VMEM (tk, tn)   bf16   (K, N)-tile of embedding weight
    # b_ref       : VMEM (1,  tn)   f32    embedding bias (zero in padded lanes)
    # masks_ref   : VMEM (NCp, tn)  f32    relu'd mask table (padded rows zero)
    # c_ref       : VMEM (Bp, 1)    i32    condition index (-1 for padded rows)
    # valid_ref   : VMEM (Bp, 1)    f32    1.0 for real batch rows else 0.0
    # masked_ref  : VMEM (Bp, tn)   f32    masked embedding output (also the
    #                                      matmul accumulator: constant index
    #                                      map across K keeps it resident)
    # partials_ref: VMEM (8,  tn)   f32    per-lane partial sums for the norms
    k = pl.program_id(1)

    @pl.when(k == 0)
    def _init():
        # fold bias into the accumulator; valid gates padded batch rows to 0
        masked_ref[...] = valid_ref[...] * b_ref[...]

    # hot path: bf16 MXU matmul, f32 accumulation directly in the output tile
    masked_ref[...] += jnp.dot(x_ref[...], w_ref[...],
                               preferred_element_type=jnp.float32)

    # epilogue only on the last K tile
    @pl.when(k == pl.num_programs(1) - 1)
    def _finalize():
        emb = masked_ref[...]                          # (Bp, tn) f32
        c_col = c_ref[...]                             # (Bp, 1)  i32

        # mask lookup: unrolled VPU compare + mul-add over the real conditions
        # (the relu is already baked into the constant table; padded rows are
        # zero and padded batch rows carry c = -1, so they stay exactly zero).
        mask = jnp.zeros_like(emb)
        for n in range(nc):
            sel = (c_col == n).astype(jnp.float32)     # (Bp, 1)
            mask = mask + sel * masks_ref[n:n + 1, :]  # broadcast -> (Bp, tn)

        masked = emb * mask
        masked_ref[...] = masked                       # lane-dense store

        # fused per-lane partial sums for the three norms; the single
        # cross-lane reduce + sqrt happens in the wrapper.  Static row stores.
        partials_ref[0:1, :] = jnp.sum(jnp.abs(mask), axis=0, keepdims=True)
        partials_ref[1:2, :] = jnp.sum(emb * emb, axis=0, keepdims=True)
        partials_ref[2:3, :] = jnp.sum(masked * masked, axis=0, keepdims=True)


def make_conditional_simnet(w, b, masks, *, tk=2048, tn=256):
    """Precompute padded/cast constant params once; return a jitted forward.

    w: (D, E) f32, b: (1, E) f32, masks: (n_conditions, E) f32.
    Returned fn: (x_nchw (B,C,H,W) f32, c (B,) i32) ->
                 (masked (B, E) f32, mask_l1 (), emb_l2 (), masked_l2 ()).
    """
    D, E = w.shape
    NC = masks.shape[0]

    E_pad = _round_up(E, 128)
    NC_pad = _round_up(max(NC, 8), 8)

    # K tile: multiple of 128, clamped to D_pad; for small D the grid collapses
    # to a single K step (kt == 1).
    tk = max(128, min(_round_up(tk, 128), _round_up(D, 128)))
    D_pad = _round_up(D, tk)
    kt = D_pad // tk

    # N tile over the embedding dim (parallel grid axis; engages both v7x
    # TensorCores once E_pad >= 2 * tn).  Degenerates to a single tile here.
    tn = max(128, _round_up(min(tn, E_pad), 128))
    if E_pad % tn:
        tn = E_pad
    nt = E_pad // tn

    # ---- constant-parameter preprocessing: done ONCE, not per call ----------
    w_p = jnp.zeros((D_pad, E_pad), jnp.bfloat16).at[:D, :E].set(
        w.astype(jnp.bfloat16))
    b_p = jnp.zeros((1, E_pad), jnp.float32).at[:, :E].set(
        b.reshape(1, E).astype(jnp.float32))
    # learnedmask=True: relu is elementwise, so relu(table)[c] == relu(table[c])
    # -> hoist the relu onto the constant table as well.
    masks_p = jnp.zeros((NC_pad, E_pad), jnp.float32).at[:NC, :E].set(
        jnp.maximum(masks.astype(jnp.float32), 0.0))

    kernel = functools.partial(csn_kernel, nc=NC)

    def forward(x_nchw, c):
        B = x_nchw.shape[0]
        assert math.prod(x_nchw.shape[1:]) == D
        B_pad = _round_up(B, 8)

        # per-call activation padding only (weights already laid out above)
        x_flat = x_nchw.reshape(B, D)
        x_p = jnp.zeros((B_pad, D_pad), jnp.bfloat16).at[:B, :D].set(
            x_flat.astype(jnp.bfloat16))
        c_p = jnp.full((B_pad, 1), -1, jnp.int32).at[:B, 0].set(
            c.astype(jnp.int32))
        valid_p = jnp.zeros((B_pad, 1), jnp.float32).at[:B, 0].set(1.0)

        masked_p, partials = pl.pallas_call(
            kernel,
            out_shape=(
                jax.ShapeDtypeStruct((B_pad, E_pad), jnp.float32),
                jax.ShapeDtypeStruct((8, E_pad), jnp.float32),
            ),
            grid_spec=pltpu.PrefetchScalarGridSpec(
                num_scalar_prefetch=0,
                grid=(nt, kt),                                       # K innermost
                in_specs=[
                    pl.BlockSpec((B_pad, tk), lambda n, k: (0, k)),      # x tile
                    pl.BlockSpec((tk, tn), lambda n, k: (k, n)),         # w tile
                    pl.BlockSpec((1, tn), lambda n, k: (0, n)),          # bias
                    pl.BlockSpec((NC_pad, tn), lambda n, k: (0, n)),     # masks
                    pl.BlockSpec((B_pad, 1), lambda n, k: (0, 0)),       # c column
                    pl.BlockSpec((B_pad, 1), lambda n, k: (0, 0)),       # row valid
                ],
                out_specs=(
                    pl.BlockSpec((B_pad, tn), lambda n, k: (0, n)),      # masked emb
                    pl.BlockSpec((8, tn), lambda n, k: (0, n)),          # norm partials
                ),
            ),
            compiler_params=pltpu.CompilerParams(
                dimension_semantics=("parallel", "arbitrary"),
                vmem_limit_bytes=32 << 20,
            ),
        )(x_p, w_p, b_p, masks_p, c_p, valid_p)

        # final cross-lane reduce + sqrt outside the kernel (padding is all
        # zero, so the padded sums are exact)
        sums = jnp.sum(partials[:3], axis=1)            # (3,)
        masked = masked_p[:B, :E]
        return masked, sums[0], jnp.sqrt(sums[1]), jnp.sqrt(sums[2])

    return jax.jit(forward)


if __name__ == "__main__":
    # Small shapes consistent with the module: batch=2, channels=4, spatial=16,
    # embedding_size=32, n_conditions=4.
    B, C_in, H, W = 2, 4, 16, 16
    D = C_in * H * W          # 1024
    E = 32                    # embedding_size
    NC = 4                    # n_conditions

    key = jax.random.PRNGKey(0)
    kx, kc, kw, kb, km = jax.random.split(key, 5)

    x = jax.random.normal(kx, (B, C_in, H, W), dtype=jnp.float32)
    c = jax.random.randint(kc, (B,), 0, NC, dtype=jnp.int32)

    # embeddingnet params (deterministic synthetic init)
    w = jax.random.normal(kw, (D, E), dtype=jnp.float32) * 0.02
    b = jax.random.normal(kb, (1, E), dtype=jnp.float32) * 0.01

    # mask embedding table: learnedmask=True, prein=False -> Normal(0.9, 0.7)
    masks = jax.random.normal(km, (NC, E), dtype=jnp.float32) * 0.7 + 0.9

    csn = make_conditional_simnet(w, b, masks)   # params padded/cast once here
    masked, mask_l1, emb_l2, masked_l2 = csn(x, c)
    jax.block_until_ready((masked, mask_l1, emb_l2, masked_l2))

    # bf16-consistent reference (kernel casts x/w to bf16, f32 accumulation)
    x_flat = x.reshape(B, D)
    emb_ref = jnp.dot(x_flat.astype(jnp.bfloat16), w.astype(jnp.bfloat16),
                      preferred_element_type=jnp.float32) + b
    mask_ref = jnp.maximum(masks[c], 0.0)
    masked_ref = emb_ref * mask_ref
    assert jnp.allclose(masked, masked_ref, atol=1e-3, rtol=1e-3)
    assert jnp.allclose(mask_l1, jnp.sum(jnp.abs(mask_ref)), atol=1e-3, rtol=1e-3)
    assert jnp.allclose(emb_l2, jnp.sqrt(jnp.sum(emb_ref ** 2)), atol=1e-3, rtol=1e-3)
    assert jnp.allclose(masked_l2, jnp.sqrt(jnp.sum(masked_ref ** 2)),
                        atol=1e-3, rtol=1e-3)

    # f32 semantics sanity check (looser: bf16 input/weight quantization)
    emb_f32 = x_flat @ w + b
    masked_f32 = emb_f32 * mask_ref
    assert jnp.allclose(masked, masked_f32, atol=3e-2, rtol=3e-2)

    print("KERNEL_OK")
</pallas_src>

<mosaic_0001>
module attributes {stable_mosaic.version = 11 : i64} {
  func.func @csn_kernel(%arg0: i32, %arg1: i32, %arg2: memref<8x1024xbf16, #tpu.memory_space<vmem>>, %arg3: memref<1024x128xbf16, #tpu.memory_space<vmem>>, %arg4: memref<1x128xf32, #tpu.memory_space<vmem>>, %arg5: memref<8x128xf32, #tpu.memory_space<vmem>>, %arg6: memref<8x1xi32, #tpu.memory_space<vmem>>, %arg7: memref<8x1xf32, #tpu.memory_space<vmem>>, %arg8: memref<8x128xf32, #tpu.memory_space<vmem>>, %arg9: memref<8x128xf32, #tpu.memory_space<vmem>>) attributes {dimension_semantics = [#tpu.dimension_semantics<parallel>, #tpu.dimension_semantics<arbitrary>], iteration_bounds = array<i64: 1, 1>, scalar_prefetch = 0 : i64, scratch_operands = 0 : i64, tpu.core_type = #tpu.core_type<tc>, window_params = [{transform_indices = @transform_0, window_bounds = array<i64: 8, 1024>}, {transform_indices = @transform_1, window_bounds = array<i64: 1024, 128>}, {transform_indices = @transform_2, window_bounds = array<i64: 1, 128>}, {transform_indices = @transform_3, window_bounds = array<i64: 8, 128>}, {pipeline_mode = #tpu.pipeline_mode<synchronous>, transform_indices = @transform_4, window_bounds = array<i64: 8, 1>}, {pipeline_mode = #tpu.pipeline_mode<synchronous>, transform_indices = @transform_5, window_bounds = array<i64: 8, 1>}, {transform_indices = @transform_6, window_bounds = array<i64: 8, 128>}, {transform_indices = @transform_7, window_bounds = array<i64: 8, 128>}]} {
    %c0_i32 = arith.constant 0 : i32
    %0 = arith.cmpi eq, %arg1, %c0_i32 : i32
    %1 = arith.extui %0 : i1 to i32
    %c0_i32_0 = arith.constant 0 : i32
    %2 = arith.cmpi ne, %1, %c0_i32_0 : i32
    scf.if %2 {
      %c0_10 = arith.constant 0 : index
      %c0_11 = arith.constant 0 : index
      %12 = vector.load %arg7[%c0_10, %c0_11] : memref<8x1xf32, #tpu.memory_space<vmem>>, vector<8x1xf32>
      %c0_12 = arith.constant 0 : index
      %c0_13 = arith.constant 0 : index
      %13 = vector.load %arg4[%c0_12, %c0_13] : memref<1x128xf32, #tpu.memory_space<vmem>>, vector<1x128xf32>
      %14 = vector.broadcast %12 : vector<8x1xf32> to vector<8x128xf32>
      %15 = vector.broadcast %13 : vector<1x128xf32> to vector<8x128xf32>
      %16 = arith.mulf %14, %15 : vector<8x128xf32>
      %c0_14 = arith.constant 0 : index
      %c0_15 = arith.constant 0 : index
      %17 = vector.load %arg8[%c0_14, %c0_15] : memref<8x128xf32, #tpu.memory_space<vmem>>, vector<8x128xf32>
      tpu.vector_store %arg8[%c0_14, %c0_15], %16 {strides = array<i32>} : memref<8x128xf32, #tpu.memory_space<vmem>>, vector<8x128xf32>,
    } else {
    }
    %c0 = arith.constant 0 : index
    %c0_1 = arith.constant 0 : index
    %3 = vector.load %arg8[%c0, %c0_1] : memref<8x128xf32, #tpu.memory_space<vmem>>, vector<8x128xf32>
    %c0_2 = arith.constant 0 : index
    %c0_3 = arith.constant 0 : index
    %4 = vector.load %arg2[%c0_2, %c0_3] : memref<8x1024xbf16, #tpu.memory_space<vmem>>, vector<8x1024xbf16>
    %c0_4 = arith.constant 0 : index
    %c0_5 = arith.constant 0 : index
    %5 = vector.load %arg3[%c0_4, %c0_5] : memref<1024x128xbf16, #tpu.memory_space<vmem>>, vector<1024x128xbf16>
    %cst = arith.constant dense<0.000000e+00> : vector<8x128xf32>
    %6 = tpu.matmul %4, %5, %cst {dimension_numbers = #tpu.dot_dimension_numbers<[1], [0], [0], [1], [0, 0, 1, 1], [], []>} : vector<8x1024xbf16>, vector<1024x128xbf16>, vector<8x128xf32> -> vector<8x128xf32>
    %7 = arith.addf %3, %6 : vector<8x128xf32>
    %c0_6 = arith.constant 0 : index
    %c0_7 = arith.constant 0 : index
    %8 = vector.load %arg8[%c0_6, %c0_7] : memref<8x128xf32, #tpu.memory_space<vmem>>, vector<8x128xf32>
    tpu.vector_store %arg8[%c0_6, %c0_7], %7 {strides = array<i32>} : memref<8x128xf32, #tpu.memory_space<vmem>>, vector<8x128xf32>,
    %c0_i32_8 = arith.constant 0 : i32
    %9 = arith.cmpi eq, %arg1, %c0_i32_8 : i32
    %10 = arith.extui %9 : i1 to i32
    %c0_i32_9 = arith.constant 0 : i32
    %11 = arith.cmpi ne, %10, %c0_i32_9 : i32
    scf.if %11 {
      %c0_10 = arith.constant 0 : index
      %c0_11 = arith.constant 0 : index
      %12 = vector.load %arg8[%c0_10, %c0_11] : memref<8x128xf32, #tpu.memory_space<vmem>>, vector<8x128xf32>
      %c0_12 = arith.constant 0 : index
      %c0_13 = arith.constant 0 : index
      %13 = vector.load %arg6[%c0_12, %c0_13] : memref<8x1xi32, #tpu.memory_space<vmem>>, vector<8x1xi32>
      %cst_14 = arith.constant 0.000000e+00 : f32
      %14 = vector.broadcast %cst_14 : f32 to vector<8x128xf32>
      %c0_i32_15 = arith.constant 0 : i32
      %15 = vector.broadcast %c0_i32_15 : i32 to vector<8x1xi32>
      %16 = arith.cmpi eq, %13, %15 : vector<8x1xi32>
      %17 = arith.extui %16 : vector<8x1xi1> to vector<8x1xi32>
      %18 = arith.sitofp %17 : vector<8x1xi32> to vector<8x1xf32>
      %c0_16 = arith.constant 0 : index
      %c0_17 = arith.constant 0 : index
      %19 = vector.load %arg5[%c0_16, %c0_17] : memref<8x128xf32, #tpu.memory_space<vmem>>, vector<1x128xf32>
      %20 = vector.broadcast %18 : vector<8x1xf32> to vector<8x128xf32>
      %21 = vector.broadcast %19 : vector<1x128xf32> to vector<8x128xf32>
      %22 = arith.mulf %20, %21 : vector<8x128xf32>
      %23 = arith.addf %14, %22 : vector<8x128xf32>
      %c1_i32 = arith.constant 1 : i32
      %24 = vector.broadcast %c1_i32 : i32 to vector<8x1xi32>
      %25 = arith.cmpi eq, %13, %24 : vector<8x1xi32>
      %26 = arith.extui %25 : vector<8x1xi1> to vector<8x1xi32>
      %27 = arith.sitofp %26 : vector<8x1xi32> to vector<8x1xf32>
      %c1 = arith.constant 1 : index
      %c0_18 = arith.constant 0 : index
      %28 = vector.load %arg5[%c1, %c0_18] : memref<8x128xf32, #tpu.memory_space<vmem>>, vector<1x128xf32>
      %29 = vector.broadcast %27 : vector<8x1xf32> to vector<8x128xf32>
      %30 = vector.broadcast %28 : vector<1x128xf32> to vector<8x128xf32>
      %31 = arith.mulf %29, %30 : vector<8x128xf32>
      %32 = arith.addf %23, %31 : vector<8x128xf32>
      %c2_i32 = arith.constant 2 : i32
      %33 = vector.broadcast %c2_i32 : i32 to vector<8x1xi32>
      %34 = arith.cmpi eq, %13, %33 : vector<8x1xi32>
      %35 = arith.extui %34 : vector<8x1xi1> to vector<8x1xi32>
      %36 = arith.sitofp %35 : vector<8x1xi32> to vector<8x1xf32>
      %c2 = arith.constant 2 : index
      %c0_19 = arith.constant 0 : index
      %37 = vector.load %arg5[%c2, %c0_19] : memref<8x128xf32, #tpu.memory_space<vmem>>, vector<1x128xf32>
      %38 = vector.broadcast %36 : vector<8x1xf32> to vector<8x128xf32>
      %39 = vector.broadcast %37 : vector<1x128xf32> to vector<8x128xf32>
      %40 = arith.mulf %38, %39 : vector<8x128xf32>
      %41 = arith.addf %32, %40 : vector<8x128xf32>
      %c3_i32 = arith.constant 3 : i32
      %42 = vector.broadcast %c3_i32 : i32 to vector<8x1xi32>
      %43 = arith.cmpi eq, %13, %42 : vector<8x1xi32>
      %44 = arith.extui %43 : vector<8x1xi1> to vector<8x1xi32>
      %45 = arith.sitofp %44 : vector<8x1xi32> to vector<8x1xf32>
      %c3 = arith.constant 3 : index
      %c0_20 = arith.constant 0 : index
      %46 = vector.load %arg5[%c3, %c0_20] : memref<8x128xf32, #tpu.memory_space<vmem>>, vector<1x128xf32>
      %47 = vector.broadcast %45 : vector<8x1xf32> to vector<8x128xf32>
      %48 = vector.broadcast %46 : vector<1x128xf32> to vector<8x128xf32>
      %49 = arith.mulf %47, %48 : vector<8x128xf32>
      %50 = arith.addf %41, %49 : vector<8x128xf32>
      %51 = arith.mulf %12, %50 : vector<8x128xf32>
      %c0_21 = arith.constant 0 : index
      %c0_22 = arith.constant 0 : index
      %52 = vector.load %arg8[%c0_21, %c0_22] : memref<8x128xf32, #tpu.memory_space<vmem>>, vector<8x128xf32>
      tpu.vector_store %arg8[%c0_21, %c0_22], %51 {strides = array<i32>} : memref<8x128xf32, #tpu.memory_space<vmem>>, vector<8x128xf32>,
      %53 = math.absf %50 : vector<8x128xf32>
      %cst_23 = arith.constant dense<0.000000e+00> : vector<128xf32>
      %54 = vector.multi_reduction <add>, %53, %cst_23 [0] : vector<8x128xf32> to vector<128xf32>
      %55 = vector.shape_cast %54 : vector<128xf32> to vector<1x128xf32>
      %c0_24 = arith.constant 0 : index
      %c0_25 = arith.constant 0 : index
      %56 = vector.load %arg9[%c0_24, %c0_25] : memref<8x128xf32, #tpu.memory_space<vmem>>, vector<1x128xf32>
      tpu.vector_store %arg9[%c0_24, %c0_25], %55 {strides = array<i32>} : memref<8x128xf32, #tpu.memory_space<vmem>>, vector<1x128xf32>,
      %57 = arith.mulf %12, %12 : vector<8x128xf32>
      %cst_26 = arith.constant dense<0.000000e+00> : vector<128xf32>
      %58 = vector.multi_reduction <add>, %57, %cst_26 [0] : vector<8x128xf32> to vector<128xf32>
      %59 = vector.shape_cast %58 : vector<128xf32> to vector<1x128xf32>
      %c1_27 = arith.constant 1 : index
      %c0_28 = arith.constant 0 : index
      %60 = vector.load %arg9[%c1_27, %c0_28] : memref<8x128xf32, #tpu.memory_space<vmem>>, vector<1x128xf32>
      tpu.vector_store %arg9[%c1_27, %c0_28], %59 {strides = array<i32>} : memref<8x128xf32, #tpu.memory_space<vmem>>, vector<1x128xf32>,
      %61 = arith.mulf %51, %51 : vector<8x128xf32>
      %cst_29 = arith.constant dense<0.000000e+00> : vector<128xf32>
      %62 = vector.multi_reduction <add>, %61, %cst_29 [0] : vector<8x128xf32> to vector<128xf32>
      %63 = vector.shape_cast %62 : vector<128xf32> to vector<1x128xf32>
      %c2_30 = arith.constant 2 : index
      %c0_31 = arith.constant 0 : index
      %64 = vector.load %arg9[%c2_30, %c0_31] : memref<8x128xf32, #tpu.memory_space<vmem>>, vector<1x128xf32>
      tpu.vector_store %arg9[%c2_30, %c0_31], %63 {strides = array<i32>} : memref<8x128xf32, #tpu.memory_space<vmem>>, vector<1x128xf32>,
    } else {
    }
    return
  }
  func.func @transform_0(%arg0: i32, %arg1: i32) -> (i32, i32) {
    %c0_i32 = arith.constant 0 : i32
    %c0_i32_0 = arith.constant 0 : i32
    return %c0_i32, %arg1 : i32, i32
  }
  func.func @transform_1(%arg0: i32, %arg1: i32) -> (i32, i32) {
    %c0_i32 = arith.constant 0 : i32
    return %arg1, %arg0 : i32, i32
  }
  func.func @transform_2(%arg0: i32, %arg1: i32) -> (i32, i32) {
    %c0_i32 = arith.constant 0 : i32
    %c0_i32_0 = arith.constant 0 : i32
    return %c0_i32, %arg0 : i32, i32
  }
  func.func @transform_3(%arg0: i32, %arg1: i32) -> (i32, i32) {
    %c0_i32 = arith.constant 0 : i32
    %c0_i32_0 = arith.constant 0 : i32
    return %c0_i32, %arg0 : i32, i32
  }
  func.func @transform_4(%arg0: i32, %arg1: i32) -> (i32, i32) {
    %c0_i32 = arith.constant 0 : i32
    %c0_i32_0 = arith.constant 0 : i32
    %c0_i32_1 = arith.constant 0 : i32
    return %c0_i32, %c0_i32_0 : i32, i32
  }
  func.func @transform_5(%arg0: i32, %arg1: i32) -> (i32, i32) {
    %c0_i32 = arith.constant 0 : i32
    %c0_i32_0 = arith.constant 0 : i32
    %c0_i32_1 = arith.constant 0 : i32
    return %c0_i32, %c0_i32_0 : i32, i32
  }
  func.func @transform_6(%arg0: i32, %arg1: i32) -> (i32, i32) {
    %c0_i32 = arith.constant 0 : i32
    %c0_i32_0 = arith.constant 0 : i32
    return %c0_i32, %arg0 : i32, i32
  }
  func.func @transform_7(%arg0: i32, %arg1: i32) -> (i32, i32) {
    %c0_i32 = arith.constant 0 : i32
    %c0_i32_0 = arith.constant 0 : i32
    return %c0_i32, %arg0 : i32, i32
  }
}

</mosaic_0001>

<llo_original>
// kernel: forward.1
$region0: #{forward.1}
  #allocation0 [shape = 'u32[]', space=smem, size = 0x4, offset = 0x4, fixed_abs, tag = 'smem constant byte address 0x4 - core index']
  #allocation1 [shape = 'u32[144,128]{1,0:T(1,128)}', space=vmem, size = 0x12000, scoped, tag = 'internal scratch']
  %s0 = inlined_call_operand.vmem [shape: bf16[8,1024], index: 0, kind: input, shape index: {}]
  %s1 = inlined_call_operand.hbm [shape: bf16[1024,128], index: 1, kind: input, shape index: {}]
  %s2 = inlined_call_operand.vmem [shape: f32[1,128], index: 2, kind: input, shape index: {}]
  %s3 = inlined_call_operand.vmem [shape: f32[8,128], index: 3, kind: input, shape index: {}]
  %s4 = inlined_call_operand.vmem [shape: s32[8,1], index: 4, kind: input, shape index: {}]
  %s5 = inlined_call_operand.vmem [shape: f32[8,1], index: 5, kind: input, shape index: {}]
  %s6 = inlined_call_operand.vmem [shape: f32[8,128], index: 6, kind: output, shape index: {0}]
  %s7 = inlined_call_operand.vmem [shape: f32[8,128], index: 7, kind: output, shape index: {1}]
  %8 = xla_tuple %s6, %s7
  %s9 = sld [smem:[#allocation0]]
  $region54: #{forward.1} parent=0
    _
  %s11 = ssub.s32 1, %s9
  %s12 = scalar_select 0, %s11, %s9
  $region1: #{forward.1} parent=0
    #allocation2 [shape = 'u8[262144]{0}', space=vmem, size = 0x40000, scoped, tag = 'input window, operand 1, single buffered']
    #allocation3 [shape = 's32[1]{0}', space=sflag, size = 0x4, scoped, tag = 'scoped memory for forward.1']
    %13 = vsyncpa [#allocation3], 0
    // Predicated region
    $region2: #{forward.1} parent=1 // pred_check
      _
    $region3: #{forward.1} parent=1 // pred_check_branch
      %15 = sbr.rel (0) target = $region5
    $region4: #{forward.1} parent=1 // pred_region
      _
    $region5: #{forward.1} parent=1 // pred_fallthru
      _
    // Predicated region
    $region6: #{forward.1} parent=1 // pred_check
      _
    $region7: #{forward.1} parent=1 // pred_check_branch
      %17 = sbr.rel (0) target = $region9
    $region8: #{forward.1} parent=1 // pred_region
      %s19 = ssub.s32 8192, 8192
      %20 = vsyncadd [#allocation3], %s19
      %s21 = sshll.u32 [#allocation2], 4
      %s22 = int_to_ptr.vmem [resolvable:$true] %s21
      %27 = dma.hbm_to_vmem [thread:$0]  %s1, 8192, %s22, [#allocation3], 64, 64, 4
    $region9: #{forward.1} parent=1 // pred_fallthru
      _
    // Predicated region
    $region10: #{forward.1} parent=1 // pred_check
      _
    $region11: #{forward.1} parent=1 // pred_check_branch
      %29 = sbr.rel (0) target = $region13
    $region12: #{forward.1} parent=1 // pred_region
      _
    $region13: #{forward.1} parent=1 // pred_fallthru
      _
    // Predicated region
    $region14: #{forward.1} parent=1 // pred_check
      _
    $region15: #{forward.1} parent=1 // pred_check_branch
      %31 = sbr.rel (0) target = $region17
    $region16: #{forward.1} parent=1 // pred_region
      _
    $region17: #{forward.1} parent=1 // pred_fallthru
      _
    // Predicated region
    $region18: #{forward.1} parent=1 // pred_check
      _
    $region19: #{forward.1} parent=1 // pred_check_branch
      %33 = sbr.rel (0) target = $region21
    $region20: #{forward.1} parent=1 // pred_region
      _
    $region21: #{forward.1} parent=1 // pred_fallthru
      _
    // Predicated region
    $region22: #{forward.1} parent=1 // pred_check
      _
    $region23: #{forward.1} parent=1 // pred_check_branch
      %35 = sbr.rel (0) target = $region25
    $region24: #{forward.1} parent=1 // pred_region
      _
    $region25: #{forward.1} parent=1 // pred_fallthru
      _
    // Predicated region
    $region26: #{forward.1} parent=1 // pred_check
      _
    $region27: #{forward.1} parent=1 // pred_check_branch
      %37 = sbr.rel (0) target = $region29
    $region28: #{forward.1} parent=1 // pred_region
      %38 = dma.done [#allocation3], 8192
    $region29: #{forward.1} parent=1 // pred_fallthru
      _
    %p40 = scmp.eq.s32.totalorder 0, 0
    // Predicated region
    $region30: #{forward.1} parent=1 // pred_check
      %p41 = pneg %p40
    $region31: #{forward.1} parent=1 // pred_check_branch
      %43 = sbr.rel (%p41) target = $region33
    $region32: #{forward.1} parent=1 // pred_region
      %v44 = vld [vmem:[%s5] sm:$0xff]
      %v45 = vld [vmem:[%s2] sm:$0x1]
      %47 = vset.pattern.permute.xlu0 0
      %48 = vperm.xlu0 %47, %v44
      %v49 = vpop.permute.xlu0 %48
      %v52 = vlaneseq
      %v53 = vshrl.u32 %v52, 7
      %v54 = vsub.s32 0, %v53
      %v55 = vrot.slane %v45, %v54
      %v57 = vmul.f32 %v49, %v55
      %58 = vst [vmem:[%s6] sm:$0xff] %v57
    $region33: #{forward.1} parent=1 // pred_fallthru
      _
    %v59 = vld [vmem:[%s6] sm:$0xff]
    %v60 = vld [vmem:[%s0] sm:$0xff]
    %v61 = vld [vmem:[%s0 + $0x8] sm:$0xff]
    %v62 = vld [vmem:[%s0 + $0x10] sm:$0xff]
    %v63 = vld [vmem:[%s0 + $0x18] sm:$0xff]
    %v64 = vld [vmem:[#allocation2] sm:$0xf]
    %v65 = vld [vmem:[#allocation2 + $0x4] sm:$0xf]
    %v66 = vld [vmem:[#allocation2 + $0x8] sm:$0xf]
    %v67 = vld [vmem:[#allocation2 + $0xc] sm:$0xf]
    %v68 = vld [vmem:[#allocation2 + $0x10] sm:$0xf]
    %v69 = vld [vmem:[#allocation2 + $0x14] sm:$0xf]
    %v70 = vld [vmem:[#allocation2 + $0x18] sm:$0xf]
    %v71 = vld [vmem:[#allocation2 + $0x1c] sm:$0xf]
    %v72 = vld [vmem:[#allocation2 + $0x20] sm:$0xf]
    %v73 = vld [vmem:[#allocation2 + $0x24] sm:$0xf]
    %v74 = vld [vmem:[#allocation2 + $0x28] sm:$0xf]
    %v75 = vld [vmem:[#allocation2 + $0x2c] sm:$0xf]
    %v76 = vld [vmem:[#allocation2 + $0x30] sm:$0xf]
    %v77 = vld [vmem:[#allocation2 + $0x34] sm:$0xf]
    %v78 = vld [vmem:[#allocation2 + $0x38] sm:$0xf]
    %v79 = vld [vmem:[#allocation2 + $0x3c] sm:$0xf]
    %v80 = vld [vmem:[#allocation2 + $0x40] sm:$0xf]
    %v81 = vld [vmem:[#allocation2 + $0x44] sm:$0xf]
    %v82 = vld [vmem:[#allocation2 + $0x48] sm:$0xf]
    %v83 = vld [vmem:[#allocation2 + $0x4c] sm:$0xf]
    %v84 = vld [vmem:[#allocation2 + $0x50] sm:$0xf]
    %v85 = vld [vmem:[#allocation2 + $0x54] sm:$0xf]
    %v86 = vld [vmem:[#allocation2 + $0x58] sm:$0xf]
    %v87 = vld [vmem:[#allocation2 + $0x5c] sm:$0xf]
    %v88 = vld [vmem:[#allocation2 + $0x60] sm:$0xf]
    %v89 = vld [vmem:[#allocation2 + $0x64] sm:$0xf]
    %v90 = vld [vmem:[#allocation2 + $0x68] sm:$0xf]
    %v91 = vld [vmem:[#allocation2 + $0x6c] sm:$0xf]
    %v92 = vld [vmem:[#allocation2 + $0x70] sm:$0xf]
    %v93 = vld [vmem:[#allocation2 + $0x74] sm:$0xf]
    %v94 = vld [vmem:[#allocation2 + $0x78] sm:$0xf]
    %v95 = vld [vmem:[#allocation2 + $0x7c] sm:$0xf]
    %v96 = vld [vmem:[#allocation2 + $0x80] sm:$0xf]
    %v97 = vld [vmem:[#allocation2 + $0x84] sm:$0xf]
    %v98 = vld [vmem:[#allocation2 + $0x88] sm:$0xf]
    %v99 = vld [vmem:[#allocation2 + $0x8c] sm:$0xf]
    %v100 = vld [vmem:[#allocation2 + $0x90] sm:$0xf]
    %v101 = vld [vmem:[#allocation2 + $0x94] sm:$0xf]
    %v102 = vld [vmem:[#allocation2 + $0x98] sm:$0xf]
    %v103 = vld [vmem:[#allocation2 + $0x9c] sm:$0xf]
    %v104 = vld [vmem:[#allocation2 + $0xa0] sm:$0xf]
    %v105 = vld [vmem:[#allocation2 + $0xa4] sm:$0xf]
    %v106 = vld [vmem:[#allocation2 + $0xa8] sm:$0xf]
    %v107 = vld [vmem:[#allocation2 + $0xac] sm:$0xf]
    %v108 = vld [vmem:[#allocation2 + $0xb0] sm:$0xf]
    %v109 = vld [vmem:[#allocation2 + $0xb4] sm:$0xf]
    %v110 = vld [vmem:[#allocation2 + $0xb8] sm:$0xf]
    %v111 = vld [vmem:[#allocation2 + $0xbc] sm:$0xf]
    %v112 = vld [vmem:[#allocation2 + $0xc0] sm:$0xf]
    %v113 = vld [vmem:[#allocation2 + $0xc4] sm:$0xf]
    %v114 = vld [vmem:[#allocation2 + $0xc8] sm:$0xf]
    %v115 = vld [vmem:[#allocation2 + $0xcc] sm:$0xf]
    %v116 = vld [vmem:[#allocation2 + $0xd0] sm:$0xf]
    %v117 = vld [vmem:[#allocation2 + $0xd4] sm:$0xf]
    %v118 = vld [vmem:[#allocation2 + $0xd8] sm:$0xf]
    %v119 = vld [vmem:[#allocation2 + $0xdc] sm:$0xf]
    %v120 = vld [vmem:[#allocation2 + $0xe0] sm:$0xf]
    %v121 = vld [vmem:[#allocation2 + $0xe4] sm:$0xf]
    %v122 = vld [vmem:[#allocation2 + $0xe8] sm:$0xf]
    %v123 = vld [vmem:[#allocation2 + $0xec] sm:$0xf]
    %v124 = vld [vmem:[#allocation2 + $0xf0] sm:$0xf]
    %v125 = vld [vmem:[#allocation2 + $0xf4] sm:$0xf]
    %v126 = vld [vmem:[#allocation2 + $0xf8] sm:$0xf]
    %v127 = vld [vmem:[#allocation2 + $0xfc] sm:$0xf]
    %v128 = vld [vmem:[#allocation2 + $0x100] sm:$0xf]
    %v129 = vld [vmem:[#allocation2 + $0x104] sm:$0xf]
    %v130 = vld [vmem:[#allocation2 + $0x108] sm:$0xf]
    %v131 = vld [vmem:[#allocation2 + $0x10c] sm:$0xf]
    %v132 = vld [vmem:[#allocation2 + $0x110] sm:$0xf]
    %v133 = vld [vmem:[#allocation2 + $0x114] sm:$0xf]
    %v134 = vld [vmem:[#allocation2 + $0x118] sm:$0xf]
    %v135 = vld [vmem:[#allocation2 + $0x11c] sm:$0xf]
    %v136 = vld [vmem:[#allocation2 + $0x120] sm:$0xf]
    %v137 = vld [vmem:[#allocation2 + $0x124] sm:$0xf]
    %v138 = vld [vmem:[#allocation2 + $0x128] sm:$0xf]
    %v139 = vld [vmem:[#allocation2 + $0x12c] sm:$0xf]
    %v140 = vld [vmem:[#allocation2 + $0x130] sm:$0xf]
    %v141 = vld [vmem:[#allocation2 + $0x134] sm:$0xf]
    %v142 = vld [vmem:[#allocation2 + $0x138] sm:$0xf]
    %v143 = vld [vmem:[#allocation2 + $0x13c] sm:$0xf]
    %v144 = vld [vmem:[#allocation2 + $0x140] sm:$0xf]
    %v145 = vld [vmem:[#allocation2 + $0x144] sm:$0xf]
    %v146 = vld [vmem:[#allocation2 + $0x148] sm:$0xf]
    %v147 = vld [vmem:[#allocation2 + $0x14c] sm:$0xf]
    %v148 = vld [vmem:[#allocation2 + $0x150] sm:$0xf]
    %v149 = vld [vmem:[#allocation2 + $0x154] sm:$0xf]
    %v150 = vld [vmem:[#allocation2 + $0x158] sm:$0xf]
    %v151 = vld [vmem:[#allocation2 + $0x15c] sm:$0xf]
    %v152 = vld [vmem:[#allocation2 + $0x160] sm:$0xf]
    %v153 = vld [vmem:[#allocation2 + $0x164] sm:$0xf]
    %v154 = vld [vmem:[#allocation2 + $0x168] sm:$0xf]
    %v155 = vld [vmem:[#allocation2 + $0x16c] sm:$0xf]
    %v156 = vld [vmem:[#allocation2 + $0x170] sm:$0xf]
    %v157 = vld [vmem:[#allocation2 + $0x174] sm:$0xf]
    %v158 = vld [vmem:[#allocation2 + $0x178] sm:$0xf]
    %v159 = vld [vmem:[#allocation2 + $0x17c] sm:$0xf]
    %v160 = vld [vmem:[#allocation2 + $0x180] sm:$0xf]
    %v161 = vld [vmem:[#allocation2 + $0x184] sm:$0xf]
    %v162 = vld [vmem:[#allocation2 + $0x188] sm:$0xf]
    %v163 = vld [vmem:[#allocation2 + $0x18c] sm:$0xf]
    %v164 = vld [vmem:[#allocation2 + $0x190] sm:$0xf]
    %v165 = vld [vmem:[#allocation2 + $0x194] sm:$0xf]
    %v166 = vld [vmem:[#allocation2 + $0x198] sm:$0xf]
    %v167 = vld [vmem:[#allocation2 + $0x19c] sm:$0xf]
    %v168 = vld [vmem:[#allocation2 + $0x1a0] sm:$0xf]
    %v169 = vld [vmem:[#allocation2 + $0x1a4] sm:$0xf]
    %v170 = vld [vmem:[#allocation2 + $0x1a8] sm:$0xf]
    %v171 = vld [vmem:[#allocation2 + $0x1ac] sm:$0xf]
    %v172 = vld [vmem:[#allocation2 + $0x1b0] sm:$0xf]
    %v173 = vld [vmem:[#allocation2 + $0x1b4] sm:$0xf]
    %v174 = vld [vmem:[#allocation2 + $0x1b8] sm:$0xf]
    %v175 = vld [vmem:[#allocation2 + $0x1bc] sm:$0xf]
    %v176 = vld [vmem:[#allocation2 + $0x1c0] sm:$0xf]
    %v177 = vld [vmem:[#allocation2 + $0x1c4] sm:$0xf]
    %v178 = vld [vmem:[#allocation2 + $0x1c8] sm:$0xf]
    %v179 = vld [vmem:[#allocation2 + $0x1cc] sm:$0xf]
    %v180 = vld [vmem:[#allocation2 + $0x1d0] sm:$0xf]
    %v181 = vld [vmem:[#allocation2 + $0x1d4] sm:$0xf]
    %v182 = vld [vmem:[#allocation2 + $0x1d8] sm:$0xf]
    %v183 = vld [vmem:[#allocation2 + $0x1dc] sm:$0xf]
    %v184 = vld [vmem:[#allocation2 + $0x1e0] sm:$0xf]
    %v185 = vld [vmem:[#allocation2 + $0x1e4] sm:$0xf]
    %v186 = vld [vmem:[#allocation2 + $0x1e8] sm:$0xf]
    %v187 = vld [vmem:[#allocation2 + $0x1ec] sm:$0xf]
    %v188 = vld [vmem:[#allocation2 + $0x1f0] sm:$0xf]
    %v189 = vld [vmem:[#allocation2 + $0x1f4] sm:$0xf]
    %v190 = vld [vmem:[#allocation2 + $0x1f8] sm:$0xf]
    %v191 = vld [vmem:[#allocation2 + $0x1fc] sm:$0xf]
    %v196 = vunpack.c.l.b16 %v60
    %v197 = vunpack.c.h.b16 %v60
    %v198 = vunpack.c.l.b16 %v61
    %v199 = vunpack.c.h.b16 %v61
    %v200 = vunpack.c.l.b16 %v62
    %v201 = vunpack.c.h.b16 %v62
    %v202 = vunpack.c.l.b16 %v63
    %v203 = vunpack.c.h.b16 %v63
    %v204 = vpack.c.b16 %v196, %v196
    %v205 = vpack.c.b16 %v197, %v197
    %v206 = vpack.c.b16 %v198, %v198
    %v207 = vpack.c.b16 %v199, %v199
    %v208 = vpack.c.b16 %v200, %v200
    %v209 = vpack.c.b16 %v201, %v201
    %v210 = vpack.c.b16 %v202, %v202
    %v211 = vpack.c.b16 %v203, %v203
    %v348 = vunpack.c.l.b16 %v64
    %v349 = vunpack.c.l.b16 %v65
    %v350 = vunpack.c.l.b16 %v66
    %v351 = vunpack.c.l.b16 %v67
    %v352 = vunpack.c.l.b16 %v68
    %v353 = vunpack.c.l.b16 %v69
    %v354 = vunpack.c.l.b16 %v70
    %v355 = vunpack.c.l.b16 %v71
    %v356 = vunpack.c.l.b16 %v72
    %v357 = vunpack.c.l.b16 %v73
    %v358 = vunpack.c.l.b16 %v74
    %v359 = vunpack.c.l.b16 %v75
    %v360 = vunpack.c.l.b16 %v76
    %v361 = vunpack.c.l.b16 %v77
    %v362 = vunpack.c.l.b16 %v78
    %v363 = vunpack.c.l.b16 %v79
    %v364 = vunpack.c.l.b16 %v80
    %v365 = vunpack.c.l.b16 %v81
    %v366 = vunpack.c.l.b16 %v82
    %v367 = vunpack.c.l.b16 %v83
    %v368 = vunpack.c.l.b16 %v84
    %v369 = vunpack.c.l.b16 %v85
    %v370 = vunpack.c.l.b16 %v86
    %v371 = vunpack.c.l.b16 %v87
    %v372 = vunpack.c.l.b16 %v88
    %v373 = vunpack.c.l.b16 %v89
    %v374 = vunpack.c.l.b16 %v90
    %v375 = vunpack.c.l.b16 %v91
    %v376 = vunpack.c.l.b16 %v92
    %v377 = vunpack.c.l.b16 %v93
    %v378 = vunpack.c.l.b16 %v94
    %v379 = vunpack.c.l.b16 %v95
    %v380 = vunpack.c.l.b16 %v96
    %v381 = vunpack.c.l.b16 %v97
    %v382 = vunpack.c.l.b16 %v98
    %v383 = vunpack.c.l.b16 %v99
    %v384 = vunpack.c.l.b16 %v100
    %v385 = vunpack.c.l.b16 %v101
    %v386 = vunpack.c.l.b16 %v102
    %v387 = vunpack.c.l.b16 %v103
    %v388 = vunpack.c.l.b16 %v104
    %v389 = vunpack.c.l.b16 %v105
    %v390 = vunpack.c.l.b16 %v106
    %v391 = vunpack.c.l.b16 %v107
    %v392 = vunpack.c.l.b16 %v108
    %v393 = vunpack.c.l.b16 %v109
    %v394 = vunpack.c.l.b16 %v110
    %v395 = vunpack.c.l.b16 %v111
    %v396 = vunpack.c.l.b16 %v112
    %v397 = vunpack.c.l.b16 %v113
    %v398 = vunpack.c.l.b16 %v114
    %v399 = vunpack.c.l.b16 %v115
    %v400 = vunpack.c.l.b16 %v116
    %v401 = vunpack.c.l.b16 %v117
    %v402 = vunpack.c.l.b16 %v118
    %v403 = vunpack.c.l.b16 %v119
    %v404 = vunpack.c.l.b16 %v120
    %v405 = vunpack.c.l.b16 %v121
    %v406 = vunpack.c.l.b16 %v122
    %v407 = vunpack.c.l.b16 %v123
    %v408 = vunpack.c.l.b16 %v124
    %v409 = vunpack.c.l.b16 %v125
    %v410 = vunpack.c.l.b16 %v126
    %v411 = vunpack.c.l.b16 %v127
    %v412 = vunpack.c.l.b16 %v128
    %v413 = vunpack.c.l.b16 %v129
    %v414 = vunpack.c.l.b16 %v130
    %v415 = vunpack.c.l.b16 %v131
    %v416 = vunpack.c.l.b16 %v132
    %v417 = vunpack.c.l.b16 %v133
    %v418 = vunpack.c.l.b16 %v134
    %v419 = vunpack.c.l.b16 %v135
    %v420 = vunpack.c.l.b16 %v136
    %v421 = vunpack.c.l.b16 %v137
    %v422 = vunpack.c.l.b16 %v138
    %v423 = vunpack.c.l.b16 %v139
    %v424 = vunpack.c.l.b16 %v140
    %v425 = vunpack.c.l.b16 %v141
    %v426 = vunpack.c.l.b16 %v142
    %v427 = vunpack.c.l.b16 %v143
    %v428 = vunpack.c.l.b16 %v144
    %v429 = vunpack.c.l.b16 %v145
    %v430 = vunpack.c.l.b16 %v146
    %v431 = vunpack.c.l.b16 %v147
    %v432 = vunpack.c.l.b16 %v148
    %v433 = vunpack.c.l.b16 %v149
    %v434 = vunpack.c.l.b16 %v150
    %v435 = vunpack.c.l.b16 %v151
    %v436 = vunpack.c.l.b16 %v152
    %v437 = vunpack.c.l.b16 %v153
    %v438 = vunpack.c.l.b16 %v154
    %v439 = vunpack.c.l.b16 %v155
    %v440 = vunpack.c.l.b16 %v156
    %v441 = vunpack.c.l.b16 %v157
    %v442 = vunpack.c.l.b16 %v158
    %v443 = vunpack.c.l.b16 %v159
    %v444 = vunpack.c.l.b16 %v160
    %v445 = vunpack.c.l.b16 %v161
    %v446 = vunpack.c.l.b16 %v162
    %v447 = vunpack.c.l.b16 %v163
    %v448 = vunpack.c.l.b16 %v164
    %v449 = vunpack.c.l.b16 %v165
    %v450 = vunpack.c.l.b16 %v166
    %v451 = vunpack.c.l.b16 %v167
    %v452 = vunpack.c.l.b16 %v168
    %v453 = vunpack.c.l.b16 %v169
    %v454 = vunpack.c.l.b16 %v170
    %v455 = vunpack.c.l.b16 %v171
    %v456 = vunpack.c.l.b16 %v172
    %v457 = vunpack.c.l.b16 %v173
    %v458 = vunpack.c.l.b16 %v174
    %v459 = vunpack.c.l.b16 %v175
    %v460 = vunpack.c.l.b16 %v176
    %v461 = vunpack.c.l.b16 %v177
    %v462 = vunpack.c.l.b16 %v178
    %v463 = vunpack.c.l.b16 %v179
    %v464 = vunpack.c.l.b16 %v180
    %v465 = vunpack.c.l.b16 %v181
    %v466 = vunpack.c.l.b16 %v182
    %v467 = vunpack.c.l.b16 %v183
    %v468 = vunpack.c.l.b16 %v184
    %v469 = vunpack.c.l.b16 %v185
    %v470 = vunpack.c.l.b16 %v186
    %v471 = vunpack.c.l.b16 %v187
    %v472 = vunpack.c.l.b16 %v188
    %v473 = vunpack.c.l.b16 %v189
    %v474 = vunpack.c.l.b16 %v190
    %v475 = vunpack.c.l.b16 %v191
    %v476 = vpack.c.b16 %v349, %v348
    %v477 = vpack.c.b16 %v351, %v350
    %v478 = vpack.c.b16 %v353, %v352
    %v479 = vpack.c.b16 %v355, %v354
    %v480 = vpack.c.b16 %v357, %v356
    %v481 = vpack.c.b16 %v359, %v358
    %v482 = vpack.c.b16 %v361, %v360
    %v483 = vpack.c.b16 %v363, %v362
    %v484 = vpack.c.b16 %v365, %v364
    %v485 = vpack.c.b16 %v367, %v366
    %v486 = vpack.c.b16 %v369, %v368
    %v487 = vpack.c.b16 %v371, %v370
    %v488 = vpack.c.b16 %v373, %v372
    %v489 = vpack.c.b16 %v375, %v374
    %v490 = vpack.c.b16 %v377, %v376
    %v491 = vpack.c.b16 %v379, %v378
    %v492 = vpack.c.b16 %v381, %v380
    %v493 = vpack.c.b16 %v383, %v382
    %v494 = vpack.c.b16 %v385, %v384
    %v495 = vpack.c.b16 %v387, %v386
    %v496 = vpack.c.b16 %v389, %v388
    %v497 = vpack.c.b16 %v391, %v390
    %v498 = vpack.c.b16 %v393, %v392
    %v499 = vpack.c.b16 %v395, %v394
    %v500 = vpack.c.b16 %v397, %v396
    %v501 = vpack.c.b16 %v399, %v398
    %v502 = vpack.c.b16 %v401, %v400
    %v503 = vpack.c.b16 %v403, %v402
    %v504 = vpack.c.b16 %v405, %v404
    %v505 = vpack.c.b16 %v407, %v406
    %v506 = vpack.c.b16 %v409, %v408
    %v507 = vpack.c.b16 %v411, %v410
    %v508 = vpack.c.b16 %v413, %v412
    %v509 = vpack.c.b16 %v415, %v414
    %v510 = vpack.c.b16 %v417, %v416
    %v511 = vpack.c.b16 %v419, %v418
    %v512 = vpack.c.b16 %v421, %v420
    %v513 = vpack.c.b16 %v423, %v422
    %v514 = vpack.c.b16 %v425, %v424
    %v515 = vpack.c.b16 %v427, %v426
    %v516 = vpack.c.b16 %v429, %v428
    %v517 = vpack.c.b16 %v431, %v430
    %v518 = vpack.c.b16 %v433, %v432
    %v519 = vpack.c.b16 %v435, %v434
    %v520 = vpack.c.b16 %v437, %v436
    %v521 = vpack.c.b16 %v439, %v438
    %v522 = vpack.c.b16 %v441, %v440
    %v523 = vpack.c.b16 %v443, %v442
    %v524 = vpack.c.b16 %v445, %v444
    %v525 = vpack.c.b16 %v447, %v446
    %v526 = vpack.c.b16 %v449, %v448
    %v527 = vpack.c.b16 %v451, %v450
    %v528 = vpack.c.b16 %v453, %v452
    %v529 = vpack.c.b16 %v455, %v454
    %v530 = vpack.c.b16 %v457, %v456
    %v531 = vpack.c.b16 %v459, %v458
    %v532 = vpack.c.b16 %v461, %v460
    %v533 = vpack.c.b16 %v463, %v462
    %v534 = vpack.c.b16 %v465, %v464
    %v535 = vpack.c.b16 %v467, %v466
    %v536 = vpack.c.b16 %v469, %v468
    %v537 = vpack.c.b16 %v471, %v470
    %v538 = vpack.c.b16 %v473, %v472
    %v539 = vpack.c.b16 %v475, %v474
    %604 = vmatprep.subr.bf16.mxu0 0
    %605 = vmatpush1.bf16.msra.mxu0 %v483
    %606 = vmatprep.subr.bf16.mxu0 0
    %607 = vmatpush1.bf16.msra.mxu0 %v482
    %608 = vmatprep.subr.bf16.mxu0 0
    %609 = vmatpush1.bf16.msra.mxu0 %v481
    %610 = vmatprep.subr.bf16.mxu0 0
    %611 = vmatpush1.bf16.msra.mxu0 %v480
    %612 = vmatprep.subr.bf16.mxu0 0
    %613 = vmatpush1.bf16.msra.mxu0 %v479
    %614 = vmatprep.subr.bf16.mxu0 0
    %615 = vmatpush1.bf16.msra.mxu0 %v478
    %616 = vmatprep.subr.bf16.mxu0 0
    %617 = vmatpush1.bf16.msra.mxu0 %v477
    %618 = vmatprep.subr.bf16.mxu0 0
    %619 = vmatpush1.bf16.msra.mxu0 %v476
    %620 = vmatprep.subr.bf16.mxu0 0
    %621 = vmatpush2.bf16.msra.mxu0 %v491
    %622 = vmatprep.subr.bf16.mxu0 0
    %623 = vmatpush2.bf16.msra.mxu0 %v490
    %624 = vmatprep.subr.bf16.mxu0 0
    %625 = vmatpush2.bf16.msra.mxu0 %v489
    %626 = vmatprep.subr.bf16.mxu0 0
    %627 = vmatpush2.bf16.msra.mxu0 %v488
    %628 = vmatprep.subr.bf16.mxu0 0
    %629 = vmatpush2.bf16.msra.mxu0 %v487
    %630 = vmatprep.subr.bf16.mxu0 0
    %631 = vmatpush2.bf16.msra.mxu0 %v486
    %632 = vmatprep.subr.bf16.mxu0 0
    %633 = vmatpush2.bf16.msra.mxu0 %v485
    %634 = vmatprep.subr.bf16.mxu0 0
    %635 = vmatpush2.bf16.msra.mxu0 %v484
    %636 = vmatprep.mubr.bf16.mxu0 %v205
    %637 = vmatmul.mubr.bf16.gmra.mxu0 %v204
    %v638 = vpop.f32.mrf.mxu0
    %v639 = vadd.f32 0.0, %v638
    %v640 = vpop.f32.mrf.mxu0
    %v641 = vpop.f32.mrf.mxu0
    %v642 = vpop.f32.mrf.mxu0
    %643 = vdwg.mxu0
    %644 = vmatprep.subr.bf16.mxu0 0
    %645 = vmatpush1.bf16.msra.mxu0 %v499
    %646 = vmatprep.subr.bf16.mxu0 0
    %647 = vmatpush1.bf16.msra.mxu0 %v498
    %648 = vmatprep.subr.bf16.mxu0 0
    %649 = vmatpush1.bf16.msra.mxu0 %v497
    %650 = vmatprep.subr.bf16.mxu0 0
    %651 = vmatpush1.bf16.msra.mxu0 %v496
    %652 = vmatprep.subr.bf16.mxu0 0
    %653 = vmatpush1.bf16.msra.mxu0 %v495
    %654 = vmatprep.subr.bf16.mxu0 0
    %655 = vmatpush1.bf16.msra.mxu0 %v494
    %656 = vmatprep.subr.bf16.mxu0 0
    %657 = vmatpush1.bf16.msra.mxu0 %v493
    %658 = vmatprep.subr.bf16.mxu0 0
    %659 = vmatpush1.bf16.msra.mxu0 %v492
    %660 = vmatprep.subr.bf16.mxu0 0
    %661 = vmatpush2.bf16.msra.mxu0 %v507
    %662 = vmatprep.subr.bf16.mxu0 0
    %663 = vmatpush2.bf16.msra.mxu0 %v506
    %664 = vmatprep.subr.bf16.mxu0 0
    %665 = vmatpush2.bf16.msra.mxu0 %v505
    %666 = vmatprep.subr.bf16.mxu0 0
    %667 = vmatpush2.bf16.msra.mxu0 %v504
    %668 = vmatprep.subr.bf16.mxu0 0
    %669 = vmatpush2.bf16.msra.mxu0 %v503
    %670 = vmatprep.subr.bf16.mxu0 0
    %671 = vmatpush2.bf16.msra.mxu0 %v502
    %672 = vmatprep.subr.bf16.mxu0 0
    %673 = vmatpush2.bf16.msra.mxu0 %v501
    %674 = vmatprep.subr.bf16.mxu0 0
    %675 = vmatpush2.bf16.msra.mxu0 %v500
    %676 = vmatprep.mubr.bf16.mxu0 %v207
    %677 = vmatmul.mubr.bf16.gmra.mxu0 %v206
    %v678 = vpop.f32.mrf.mxu0
    %v679 = vadd.f32 %v639, %v678
    %v680 = vpop.f32.mrf.mxu0
    %v681 = vpop.f32.mrf.mxu0
    %v682 = vpop.f32.mrf.mxu0
    %683 = vdwg.mxu0
    %684 = vmatprep.subr.bf16.mxu0 0
    %685 = vmatpush1.bf16.msra.mxu0 %v515
    %686 = vmatprep.subr.bf16.mxu0 0
    %687 = vmatpush1.bf16.msra.mxu0 %v514
    %688 = vmatprep.subr.bf16.mxu0 0
    %689 = vmatpush1.bf16.msra.mxu0 %v513
    %690 = vmatprep.subr.bf16.mxu0 0
    %691 = vmatpush1.bf16.msra.mxu0 %v512
    %692 = vmatprep.subr.bf16.mxu0 0
    %693 = vmatpush1.bf16.msra.mxu0 %v511
    %694 = vmatprep.subr.bf16.mxu0 0
    %695 = vmatpush1.bf16.msra.mxu0 %v510
    %696 = vmatprep.subr.bf16.mxu0 0
    %697 = vmatpush1.bf16.msra.mxu0 %v509
    %698 = vmatprep.subr.bf16.mxu0 0
    %699 = vmatpush1.bf16.msra.mxu0 %v508
    %700 = vmatprep.subr.bf16.mxu0 0
    %701 = vmatpush2.bf16.msra.mxu0 %v523
    %702 = vmatprep.subr.bf16.mxu0 0
    %703 = vmatpush2.bf16.msra.mxu0 %v522
    %704 = vmatprep.subr.bf16.mxu0 0
    %705 = vmatpush2.bf16.msra.mxu0 %v521
    %706 = vmatprep.subr.bf16.mxu0 0
    %707 = vmatpush2.bf16.msra.mxu0 %v520
    %708 = vmatprep.subr.bf16.mxu0 0
    %709 = vmatpush2.bf16.msra.mxu0 %v519
    %710 = vmatprep.subr.bf16.mxu0 0
    %711 = vmatpush2.bf16.msra.mxu0 %v518
    %712 = vmatprep.subr.bf16.mxu0 0
    %713 = vmatpush2.bf16.msra.mxu0 %v517
    %714 = vmatprep.subr.bf16.mxu0 0
    %715 = vmatpush2.bf16.msra.mxu0 %v516
    %716 = vmatprep.mubr.bf16.mxu0 %v209
    %717 = vmatmul.mubr.bf16.gmra.mxu0 %v208
    %v718 = vpop.f32.mrf.mxu0
    %v719 = vadd.f32 %v679, %v718
    %v720 = vpop.f32.mrf.mxu0
    %v721 = vpop.f32.mrf.mxu0
    %v722 = vpop.f32.mrf.mxu0
    %723 = vdwg.mxu0
    %724 = vmatprep.subr.bf16.mxu0 0
    %725 = vmatpush1.bf16.msra.mxu0 %v531
    %726 = vmatprep.subr.bf16.mxu0 0
    %727 = vmatpush1.bf16.msra.mxu0 %v530
    %728 = vmatprep.subr.bf16.mxu0 0
    %729 = vmatpush1.bf16.msra.mxu0 %v529
    %730 = vmatprep.subr.bf16.mxu0 0
    %731 = vmatpush1.bf16.msra.mxu0 %v528
    %732 = vmatprep.subr.bf16.mxu0 0
    %733 = vmatpush1.bf16.msra.mxu0 %v527
    %734 = vmatprep.subr.bf16.mxu0 0
    %735 = vmatpush1.bf16.msra.mxu0 %v526
    %736 = vmatprep.subr.bf16.mxu0 0
    %737 = vmatpush1.bf16.msra.mxu0 %v525
    %738 = vmatprep.subr.bf16.mxu0 0
    %739 = vmatpush1.bf16.msra.mxu0 %v524
    %740 = vmatprep.subr.bf16.mxu0 0
    %741 = vmatpush2.bf16.msra.mxu0 %v539
    %742 = vmatprep.subr.bf16.mxu0 0
    %743 = vmatpush2.bf16.msra.mxu0 %v538
    %744 = vmatprep.subr.bf16.mxu0 0
    %745 = vmatpush2.bf16.msra.mxu0 %v537
    %746 = vmatprep.subr.bf16.mxu0 0
    %747 = vmatpush2.bf16.msra.mxu0 %v536
    %748 = vmatprep.subr.bf16.mxu0 0
    %749 = vmatpush2.bf16.msra.mxu0 %v535
    %750 = vmatprep.subr.bf16.mxu0 0
    %751 = vmatpush2.bf16.msra.mxu0 %v534
    %752 = vmatprep.subr.bf16.mxu0 0
    %753 = vmatpush2.bf16.msra.mxu0 %v533
    %754 = vmatprep.subr.bf16.mxu0 0
    %755 = vmatpush2.bf16.msra.mxu0 %v532
    %756 = vmatprep.mubr.bf16.mxu0 %v211
    %757 = vmatmul.mubr.bf16.gmra.mxu0 %v210
    %v758 = vpop.f32.mrf.mxu0
    %v759 = vadd.f32 %v719, %v758
    %v760 = vpop.f32.mrf.mxu0
    %v761 = vpop.f32.mrf.mxu0
    %v762 = vpop.f32.mrf.mxu0
    %763 = vdwg.mxu0
    %v764 = vadd.f32 %v59, %v759
    %765 = vst [vmem:[%s6] sm:$0xff] %v764
    // Predicated region
    $region34: #{forward.1} parent=1 // pred_check
      %p766 = pneg %p40
    $region35: #{forward.1} parent=1 // pred_check_branch
      %768 = sbr.rel (%p766) target = $region37
    $region36: #{forward.1} parent=1 // pred_region
      %v769 = vld [vmem:[%s6] sm:$0xff]
      %v770 = vld [vmem:[%s4] sm:$0xff]
      %vm771 = vcmp.eq.s32.totalorder %v770, 0
      %v772 = vsel %vm771, 1, 0
      %v773 = vcvt.s32.f32 %v772
      %v774 = vld [vmem:[%s3] sm:$0x1]
      %776 = vset.pattern.permute.xlu0 0
      %777 = vperm.xlu0 %776, %v773
      %v778 = vpop.permute.xlu0 %777
      %v780 = vlaneseq
      %v781 = vshrl.u32 %v780, 7
      %v782 = vsub.s32 0, %v781
      %v783 = vrot.slane %v774, %v782
      %v784 = vmul.f32 %v778, %v783
      %v785 = vadd.f32 %v784, 0.0
      %vm786 = vcmp.eq.s32.totalorder %v770, 1
      %v787 = vsel %vm786, 1, 0
      %v788 = vcvt.s32.f32 %v787
      %v789 = vld [vmem:[%s3 + $0x1] sm:$0x1]
      %791 = vset.pattern.permute.xlu0 0
      %792 = vperm.xlu0 %791, %v788
      %v793 = vpop.permute.xlu0 %792
      %v795 = vlaneseq
      %v796 = vshrl.u32 %v795, 7
      %v797 = vsub.s32 0, %v796
      %v798 = vrot.slane %v789, %v797
      %v799 = vmul.f32 %v793, %v798
      %v800 = vadd.f32 %v785, %v799
      %vm801 = vcmp.eq.s32.totalorder %v770, 2
      %v802 = vsel %vm801, 1, 0
      %v803 = vcvt.s32.f32 %v802
      %v804 = vld [vmem:[%s3 + $0x2] sm:$0x1]
      %806 = vset.pattern.permute.xlu0 0
      %807 = vperm.xlu0 %806, %v803
      %v808 = vpop.permute.xlu0 %807
      %v810 = vlaneseq
      %v811 = vshrl.u32 %v810, 7
      %v812 = vsub.s32 0, %v811
      %v813 = vrot.slane %v804, %v812
      %v814 = vmul.f32 %v808, %v813
      %v815 = vadd.f32 %v800, %v814
      %vm816 = vcmp.eq.s32.totalorder %v770, 3
      %v817 = vsel %vm816, 1, 0
      %v818 = vcvt.s32.f32 %v817
      %v819 = vld [vmem:[%s3 + $0x3] sm:$0x1]
      %821 = vset.pattern.permute.xlu0 0
      %822 = vperm.xlu0 %821, %v818
      %v823 = vpop.permute.xlu0 %822
      %v825 = vlaneseq
      %v826 = vshrl.u32 %v825, 7
      %v827 = vsub.s32 0, %v826
      %v828 = vrot.slane %v819, %v827
      %v829 = vmul.f32 %v823, %v828
      %v830 = vadd.f32 %v815, %v829
      %v831 = vmul.f32 %v769, %v830
      %832 = vst [vmem:[%s6] sm:$0xff] %v831
      %v833 = vand.u32 2147483647, %v830
      %v834 = vrot.slane %v833, 4
      %v835 = vadd.f32 %v833, %v834
      %v836 = vrot.slane %v835, 2
      %v837 = vadd.f32 %v835, %v836
      %v838 = vrot.slane %v837, 1
      %v839 = vadd.f32 %v837, %v838
      %840 = vst [vmem:[%s7] sm:$0x1] %v839
      %v841 = vmul.f32 %v769, %v769
      %v842 = vrot.slane %v841, 4
      %v843 = vadd.f32 %v841, %v842
      %v844 = vrot.slane %v843, 2
      %v845 = vadd.f32 %v843, %v844
      %v846 = vrot.slane %v845, 1
      %v847 = vadd.f32 %v845, %v846
      %848 = vst [vmem:[%s7 + $0x1] sm:$0x1] %v847
      %v849 = vmul.f32 %v831, %v831
      %v850 = vrot.slane %v849, 4
      %v851 = vadd.f32 %v849, %v850
      %v852 = vrot.slane %v851, 2
      %v853 = vadd.f32 %v851, %v852
      %v854 = vrot.slane %v853, 1
      %v855 = vadd.f32 %v853, %v854
      %856 = vst [vmem:[%s7 + $0x2] sm:$0x1] %v855
    $region37: #{forward.1} parent=1 // pred_fallthru
      _
    // Predicated region
    $region38: #{forward.1} parent=1 // pred_check
      _
    $region39: #{forward.1} parent=1 // pred_check_branch
      %858 = sbr.rel (0) target = $region41
    $region40: #{forward.1} parent=1 // pred_region
      _
    $region41: #{forward.1} parent=1 // pred_fallthru
      _
    // Predicated region
    $region42: #{forward.1} parent=1 // pred_check
      _
    $region43: #{forward.1} parent=1 // pred_check_branch
      %860 = sbr.rel (0) target = $region45
    $region44: #{forward.1} parent=1 // pred_region
      _
    $region45: #{forward.1} parent=1 // pred_fallthru
      _
    // Predicated region
    $region46: #{forward.1} parent=1 // pred_check
      _
    $region47: #{forward.1} parent=1 // pred_check_branch
      %862 = sbr.rel (0) target = $region49
    $region48: #{forward.1} parent=1 // pred_region
      _
    $region49: #{forward.1} parent=1 // pred_fallthru
      _
    // Predicated region
    $region50: #{forward.1} parent=1 // pred_check
      _
    $region51: #{forward.1} parent=1 // pred_check_branch
      %864 = sbr.rel (0) target = $region53
    $region52: #{forward.1} parent=1 // pred_region
      _
    $region53: #{forward.1} parent=1 // pred_fallthru
      _
    %865 = vsyncpa [#allocation3], 1

</llo_original>
